<compile_context>
chip_gen: v7x
topology: tpu7x:2x2x1
jax: 0.10.0
libtpu: 0.0.40
codegen_flags: <defaults>
</compile_context>

<pallas_src>
import jax
import jax.numpy as jnp
from jax.experimental import pallas as pl
from jax.experimental.pallas import tpu as pltpu

CHANNELS = 2
DIM = 3
HIDDEN = 512


def _round_up(n, m):
    return ((n + m - 1) // m) * m


def _collab_kernel(x_ref, w1_ref, b1_ref, w2_ref, b2_ref, out_ref):
    # x_ref  : (TB, in_feat)      f32   flattened input tile
    # w1_ref : (in_feat, hidden)  f32   fc1 weight, pre-transposed to (in, out)
    # b1_ref : (1, hidden)        f32   fc1 bias
    # w2_ref : (hidden, dim)      f32   fc2 weight, pre-transposed to (in, out)
    # b2_ref : (1, dim)           f32   fc2 bias
    # out_ref: (TB, dim)          f32   fc2 logits (no softmax in forward)
    x = x_ref[...]
    h = jnp.dot(x, w1_ref[...], preferred_element_type=jnp.float32) + b1_ref[...]
    h = jnp.maximum(h, 0.0)                                    # ReLU
    logits = jnp.dot(h, w2_ref[...], preferred_element_type=jnp.float32) + b2_ref[...]
    out_ref[...] = logits.astype(out_ref.dtype)


def collaboration_net_forward(x, fc1_w, fc1_b, fc2_w, fc2_b, *, block_b=512):
    """JAX/Pallas equivalent of CollaborationNet.forward.

    x     : (B, channels, dim) float
    fc1_w : (hidden, channels*dim)  -- PyTorch (out, in) layout
    fc1_b : (hidden,)
    fc2_w : (dim, hidden)           -- PyTorch (out, in) layout
    fc2_b : (dim,)
    returns (B, dim) float32 logits
    """
    B = x.shape[0]
    hidden, in_feat = fc1_w.shape
    dim = fc2_w.shape[0]

    # nn.Flatten (start_dim=1)
    xf = x.reshape(B, -1).astype(jnp.float32)
    assert xf.shape[1] == in_feat

    # One-time wrapper-side transposes: present weights to the MXU in (in, out) layout so the
    # kernel never does a .T / XLU relayout per grid step.
    w1_t = jnp.asarray(fc1_w, jnp.float32).T           # (in_feat, hidden)
    w2_t = jnp.asarray(fc2_w, jnp.float32).T           # (hidden, dim)
    b1_r = jnp.asarray(fc1_b, jnp.float32).reshape(1, hidden)
    b2_r = jnp.asarray(fc2_b, jnp.float32).reshape(1, dim)

    # Batch tiling: pad B up so every grid step is a full tile, slice the padding off afterwards.
    tb = min(block_b, _round_up(B, 8))
    bp = _round_up(B, tb)
    if bp != B:
        xf = jnp.pad(xf, ((0, bp - B), (0, 0)))

    grid = (bp // tb,)
    out = pl.pallas_call(
        _collab_kernel,
        out_shape=jax.ShapeDtypeStruct((bp, dim), jnp.float32),
        grid=grid,
        in_specs=[
            pl.BlockSpec((tb, in_feat), lambda i: (i, 0)),       # x tile follows the batch grid
            pl.BlockSpec((in_feat, hidden), lambda i: (0, 0)),   # small params: same block every step
            pl.BlockSpec((1, hidden), lambda i: (0, 0)),
            pl.BlockSpec((hidden, dim), lambda i: (0, 0)),
            pl.BlockSpec((1, dim), lambda i: (0, 0)),
        ],
        out_specs=pl.BlockSpec((tb, dim), lambda i: (i, 0)),
        compiler_params=pltpu.CompilerParams(
            dimension_semantics=("parallel",),                   # batch axis is embarrassingly parallel
        ),
    )(xf, w1_t, b1_r, w2_t, b2_r)
    return out[:B]


def _reference_forward(x, fc1_w, fc1_b, fc2_w, fc2_b):
    xf = x.reshape(x.shape[0], -1).astype(jnp.float32)
    h = jnp.maximum(xf @ fc1_w.T + fc1_b, 0.0)
    return h @ fc2_w.T + fc2_b


if __name__ == "__main__":
    key = jax.random.PRNGKey(0)
    k_x, k_w1, k_b1, k_w2, k_b2, k_x2 = jax.random.split(key, 6)

    in_feat = CHANNELS * DIM  # 6

    # Deterministic synthetic parameters (shapes from CollaborationNet.__init__ defaults).
    fc1_w = jax.random.normal(k_w1, (HIDDEN, in_feat), jnp.float32) * 0.05
    fc1_b = jax.random.normal(k_b1, (HIDDEN,), jnp.float32) * 0.05
    fc2_w = jax.random.normal(k_w2, (DIM, HIDDEN), jnp.float32) * 0.05
    fc2_b = jax.random.normal(k_b2, (DIM,), jnp.float32) * 0.05

    # Small batch (single grid step, padded 4 -> 8 rows).
    x_small = jax.random.normal(k_x, (4, CHANNELS, DIM), jnp.float32)
    out_small = collaboration_net_forward(x_small, fc1_w, fc1_b, fc2_w, fc2_b)

    # Slightly larger batch that exercises a multi-step grid + batch padding (300 -> 3 tiles of 128).
    x_big = jax.random.normal(k_x2, (300, CHANNELS, DIM), jnp.float32)
    out_big = collaboration_net_forward(x_big, fc1_w, fc1_b, fc2_w, fc2_b, block_b=128)

    jax.block_until_ready((out_small, out_big))

    ref_small = _reference_forward(x_small, fc1_w, fc1_b, fc2_w, fc2_b)
    ref_big = _reference_forward(x_big, fc1_w, fc1_b, fc2_w, fc2_b)

    assert out_small.shape == (4, DIM)
    assert out_big.shape == (300, DIM)
    assert jnp.allclose(out_small, ref_small, atol=1e-4), "small-batch mismatch"
    assert jnp.allclose(out_big, ref_big, atol=1e-4), "multi-tile batch mismatch"

    print("KERNEL_OK")
</pallas_src>

<mosaic_0001>
module attributes {stable_mosaic.version = 11 : i64} {
  func.func @_collab_kernel(%arg0: i32, %arg1: memref<8x6xf32, #tpu.memory_space<vmem>>, %arg2: memref<6x512xf32, #tpu.memory_space<vmem>>, %arg3: memref<1x512xf32, #tpu.memory_space<vmem>>, %arg4: memref<512x3xf32, #tpu.memory_space<vmem>>, %arg5: memref<1x3xf32, #tpu.memory_space<vmem>>, %arg6: memref<8x3xf32, #tpu.memory_space<vmem>>) attributes {dimension_semantics = [#tpu.dimension_semantics<parallel>], iteration_bounds = array<i64: 1>, scalar_prefetch = 0 : i64, scratch_operands = 0 : i64, tpu.core_type = #tpu.core_type<tc>, window_params = [{transform_indices = @transform_0, window_bounds = array<i64: 8, 6>}, {pipeline_mode = #tpu.pipeline_mode<synchronous>, transform_indices = @transform_1, window_bounds = array<i64: 6, 512>}, {pipeline_mode = #tpu.pipeline_mode<synchronous>, transform_indices = @transform_2, window_bounds = array<i64: 1, 512>}, {pipeline_mode = #tpu.pipeline_mode<synchronous>, transform_indices = @transform_3, window_bounds = array<i64: 512, 3>}, {pipeline_mode = #tpu.pipeline_mode<synchronous>, transform_indices = @transform_4, window_bounds = array<i64: 1, 3>}, {transform_indices = @transform_5, window_bounds = array<i64: 8, 3>}]} {
    %c0 = arith.constant 0 : index
    %c0_0 = arith.constant 0 : index
    %0 = vector.load %arg1[%c0, %c0_0] : memref<8x6xf32, #tpu.memory_space<vmem>>, vector<8x6xf32>
    %c0_1 = arith.constant 0 : index
    %c0_2 = arith.constant 0 : index
    %1 = vector.load %arg2[%c0_1, %c0_2] : memref<6x512xf32, #tpu.memory_space<vmem>>, vector<6x512xf32>
    %cst = arith.constant dense<0.000000e+00> : vector<8x512xf32>
    %2 = tpu.matmul %0, %1, %cst {dimension_numbers = #tpu.dot_dimension_numbers<[1], [0], [0], [1], [0, 0, 1, 1], [], []>} : vector<8x6xf32>, vector<6x512xf32>, vector<8x512xf32> -> vector<8x512xf32>
    %c0_3 = arith.constant 0 : index
    %c0_4 = arith.constant 0 : index
    %3 = vector.load %arg3[%c0_3, %c0_4] : memref<1x512xf32, #tpu.memory_space<vmem>>, vector<1x512xf32>
    %4 = vector.broadcast %3 : vector<1x512xf32> to vector<8x512xf32>
    %5 = arith.addf %2, %4 : vector<8x512xf32>
    %cst_5 = arith.constant 0.000000e+00 : f32
    %6 = vector.broadcast %cst_5 : f32 to vector<8x512xf32>
    %7 = arith.maximumf %5, %6 : vector<8x512xf32>
    %c0_6 = arith.constant 0 : index
    %c0_7 = arith.constant 0 : index
    %8 = vector.load %arg4[%c0_6, %c0_7] : memref<512x3xf32, #tpu.memory_space<vmem>>, vector<512x3xf32>
    %cst_8 = arith.constant dense<0.000000e+00> : vector<8x3xf32>
    %9 = tpu.matmul %7, %8, %cst_8 {dimension_numbers = #tpu.dot_dimension_numbers<[1], [0], [0], [1], [0, 0, 1, 1], [], []>} : vector<8x512xf32>, vector<512x3xf32>, vector<8x3xf32> -> vector<8x3xf32>
    %c0_9 = arith.constant 0 : index
    %c0_10 = arith.constant 0 : index
    %10 = vector.load %arg5[%c0_9, %c0_10] : memref<1x3xf32, #tpu.memory_space<vmem>>, vector<1x3xf32>
    %11 = vector.broadcast %10 : vector<1x3xf32> to vector<8x3xf32>
    %12 = arith.addf %9, %11 : vector<8x3xf32>
    %c0_11 = arith.constant 0 : index
    %c0_12 = arith.constant 0 : index
    %13 = vector.load %arg6[%c0_11, %c0_12] : memref<8x3xf32, #tpu.memory_space<vmem>>, vector<8x3xf32>
    tpu.vector_store %arg6[%c0_11, %c0_12], %12 {strides = array<i32>} : memref<8x3xf32, #tpu.memory_space<vmem>>, vector<8x3xf32>,
    return
  }
  func.func @transform_0(%arg0: i32) -> (i32, i32) {
    %c0_i32 = arith.constant 0 : i32
    %c0_i32_0 = arith.constant 0 : i32
    return %arg0, %c0_i32 : i32, i32
  }
  func.func @transform_1(%arg0: i32) -> (i32, i32) {
    %c0_i32 = arith.constant 0 : i32
    %c0_i32_0 = arith.constant 0 : i32
    %c0_i32_1 = arith.constant 0 : i32
    return %c0_i32, %c0_i32_0 : i32, i32
  }
  func.func @transform_2(%arg0: i32) -> (i32, i32) {
    %c0_i32 = arith.constant 0 : i32
    %c0_i32_0 = arith.constant 0 : i32
    %c0_i32_1 = arith.constant 0 : i32
    return %c0_i32, %c0_i32_0 : i32, i32
  }
  func.func @transform_3(%arg0: i32) -> (i32, i32) {
    %c0_i32 = arith.constant 0 : i32
    %c0_i32_0 = arith.constant 0 : i32
    %c0_i32_1 = arith.constant 0 : i32
    return %c0_i32, %c0_i32_0 : i32, i32
  }
  func.func @transform_4(%arg0: i32) -> (i32, i32) {
    %c0_i32 = arith.constant 0 : i32
    %c0_i32_0 = arith.constant 0 : i32
    %c0_i32_1 = arith.constant 0 : i32
    return %c0_i32, %c0_i32_0 : i32, i32
  }
  func.func @transform_5(%arg0: i32) -> (i32, i32) {
    %c0_i32 = arith.constant 0 : i32
    %c0_i32_0 = arith.constant 0 : i32
    return %arg0, %c0_i32 : i32, i32
  }
}

</mosaic_0001>

<llo_original>
// kernel: tpu_custom_call.1
$region0: #{tpu_custom_call.1}
  #allocation0 [shape = 'u32[]', space=smem, size = 0x4, offset = 0x4, fixed_abs, tag = 'smem constant byte address 0x4 - core index']
  #allocation1 [shape = 'u32[144,128]{1,0:T(1,128)}', space=vmem, size = 0x12000, scoped, tag = 'internal scratch']
  %s0 = inlined_call_operand.vmem [shape: f32[8,6], index: 0, kind: input, shape index: {}]
  %s1 = inlined_call_operand.vmem [shape: f32[6,512], index: 1, kind: input, shape index: {}]
  %s2 = inlined_call_operand.vmem [shape: f32[1,512], index: 2, kind: input, shape index: {}]
  %s3 = inlined_call_operand.vmem [shape: f32[512,3], index: 3, kind: input, shape index: {}]
  %s4 = inlined_call_operand.vmem [shape: f32[1,3], index: 4, kind: input, shape index: {}]
  %s5 = inlined_call_operand.vmem [shape: f32[8,3], index: 5, kind: output, shape index: {}]
  %s6 = sld [smem:[#allocation0]]
  $region30: #{tpu_custom_call.1} parent=0
    _
  %s8 = ssub.s32 1, %s6
  %s9 = scalar_select 0, %s8, %s6
  // Predicated region
  $region2: #{tpu_custom_call.1} parent=0 // pred_check
    _
  $region3: #{tpu_custom_call.1} parent=0 // pred_check_branch
    %11 = sbr.rel (0) target = $region5
  $region4: #{tpu_custom_call.1} parent=0 // pred_region
    _
  $region5: #{tpu_custom_call.1} parent=0 // pred_fallthru
    _
  // Predicated region
  $region6: #{tpu_custom_call.1} parent=0 // pred_check
    _
  $region7: #{tpu_custom_call.1} parent=0 // pred_check_branch
    %13 = sbr.rel (0) target = $region9
  $region8: #{tpu_custom_call.1} parent=0 // pred_region
    _
  $region9: #{tpu_custom_call.1} parent=0 // pred_fallthru
    _
  // Predicated region
  $region10: #{tpu_custom_call.1} parent=0 // pred_check
    _
  $region11: #{tpu_custom_call.1} parent=0 // pred_check_branch
    %15 = sbr.rel (0) target = $region13
  $region12: #{tpu_custom_call.1} parent=0 // pred_region
    _
  $region13: #{tpu_custom_call.1} parent=0 // pred_fallthru
    _
  // Predicated region
  $region14: #{tpu_custom_call.1} parent=0 // pred_check
    _
  $region15: #{tpu_custom_call.1} parent=0 // pred_check_branch
    %17 = sbr.rel (0) target = $region17
  $region16: #{tpu_custom_call.1} parent=0 // pred_region
    _
  $region17: #{tpu_custom_call.1} parent=0 // pred_fallthru
    _
  // Predicated region
  $region18: #{tpu_custom_call.1} parent=0 // pred_check
    _
  $region19: #{tpu_custom_call.1} parent=0 // pred_check_branch
    %19 = sbr.rel (0) target = $region21
  $region20: #{tpu_custom_call.1} parent=0 // pred_region
    _
  $region21: #{tpu_custom_call.1} parent=0 // pred_fallthru
    _
  %v20 = vld [vmem:[%s0] sm:$0xff]
  %v21 = vld [vmem:[%s1] sm:$0x3f]
  %v22 = vld [vmem:[%s1 + $0x8] sm:$0x3f]
  %v23 = vld [vmem:[%s1 + $0x10] sm:$0x3f]
  %v24 = vld [vmem:[%s1 + $0x18] sm:$0x3f]
  %v25 = vld [vmem:[%s2] sm:$0xf]
  %v27 = vlaneseq
  %v28 = vshrl.u32 %v27, 7
  %v29 = vsub.s32 0, %v28
  %v30 = vrot.slane %v25, %v29
  %v31 = vlaneseq
  %v32 = vshrl.u32 %v31, 7
  %v33 = vsub.s32 1, %v32
  %v34 = vrot.slane %v25, %v33
  %v35 = vlaneseq
  %v36 = vshrl.u32 %v35, 7
  %v37 = vsub.s32 2, %v36
  %v38 = vrot.slane %v25, %v37
  %v39 = vlaneseq
  %v40 = vshrl.u32 %v39, 7
  %v41 = vsub.s32 3, %v40
  %v42 = vrot.slane %v25, %v41
  %vm47 = vcmask 48128
  %v49 = vsel %vm47, %v20, 0
  %vm51 = vcmask 1045504
  %v53 = vsel %vm51, %v21, 0
  %v56 = vsel %vm51, %v22, 0
  %v59 = vsel %vm51, %v23, 0
  %v62 = vsel %vm51, %v24, 0
  %64 = vmatprep.subr.mxu0 %v56
  %65 = vmatpush1.msra.mxu0 %v53
  %66 = vmatprep.subr.mxu0 0.0
  %67 = vmatpush1.msra.mxu0 0.0
  %68 = vmatprep.subr.mxu0 0.0
  %69 = vmatpush1.msra.mxu0 0.0
  %70 = vmatprep.subr.mxu0 0.0
  %71 = vmatpush1.msra.mxu0 0.0
  %72 = vmatprep.subr.mxu0 0.0
  %73 = vmatpush1.msra.mxu0 0.0
  %74 = vmatprep.subr.mxu0 0.0
  %75 = vmatpush1.msra.mxu0 0.0
  %76 = vmatprep.subr.mxu0 0.0
  %77 = vmatpush1.msra.mxu0 0.0
  %78 = vmatprep.subr.mxu0 0.0
  %79 = vmatpush1.msra.mxu0 0.0
  %80 = vmatprep.subr.mxu0 0.0
  %81 = vmatpush1.msra.mxu0 0.0
  %82 = vmatprep.subr.mxu0 0.0
  %83 = vmatpush1.msra.mxu0 0.0
  %84 = vmatprep.subr.mxu0 0.0
  %85 = vmatpush1.msra.mxu0 0.0
  %86 = vmatprep.subr.mxu0 0.0
  %87 = vmatpush1.msra.mxu0 0.0
  %88 = vmatprep.subr.mxu0 0.0
  %89 = vmatpush1.msra.mxu0 0.0
  %90 = vmatprep.subr.mxu0 0.0
  %91 = vmatpush1.msra.mxu0 0.0
  %92 = vmatprep.subr.mxu0 0.0
  %93 = vmatpush1.msra.mxu0 0.0
  %94 = vmatprep.subr.mxu0 0.0
  %95 = vmatpush1.msra.mxu0 0.0
  %96 = vmatprep.subr.mxu0 0.0
  %97 = vmatpush1.msra.mxu0 0.0
  %98 = vmatprep.subr.mxu0 0.0
  %99 = vmatpush1.msra.mxu0 0.0
  %100 = vmatprep.subr.mxu0 0.0
  %101 = vmatpush1.msra.mxu0 0.0
  %102 = vmatprep.subr.mxu0 0.0
  %103 = vmatpush1.msra.mxu0 0.0
  %104 = vmatprep.subr.mxu0 0.0
  %105 = vmatpush1.msra.mxu0 0.0
  %106 = vmatprep.subr.mxu0 0.0
  %107 = vmatpush1.msra.mxu0 0.0
  %108 = vmatprep.subr.mxu0 0.0
  %109 = vmatpush1.msra.mxu0 0.0
  %110 = vmatprep.subr.mxu0 0.0
  %111 = vmatpush1.msra.mxu0 0.0
  %112 = vmatprep.subr.mxu0 0.0
  %113 = vmatpush1.msra.mxu0 0.0
  %114 = vmatprep.subr.mxu0 0.0
  %115 = vmatpush1.msra.mxu0 0.0
  %116 = vmatprep.subr.mxu0 0.0
  %117 = vmatpush1.msra.mxu0 0.0
  %118 = vmatprep.subr.mxu0 0.0
  %119 = vmatpush1.msra.mxu0 0.0
  %120 = vmatprep.subr.mxu0 0.0
  %121 = vmatpush1.msra.mxu0 0.0
  %122 = vmatprep.subr.mxu0 0.0
  %123 = vmatpush1.msra.mxu0 0.0
  %124 = vmatprep.subr.mxu0 0.0
  %125 = vmatpush1.msra.mxu0 0.0
  %126 = vmatprep.subr.mxu0 0.0
  %127 = vmatpush1.msra.mxu0 0.0
  %128 = vmatprep.mubr.f32.mxu0 0.0
  %129 = vmatmul.mubr.f32.gmra.mrb[0].mxu0 %v49
  %v130 = vpop.f32.mrb[0].mxu0
  %v131 = vadd.f32 %v30, %v130
  %v132 = vpop.f32.mrb[0].mxu0
  %v133 = vadd.f32 %v34, %v132
  %134 = vdwg.mxu0
  %135 = vmatprep.subr.mxu0 %v62
  %136 = vmatpush1.msra.mxu0 %v59
  %137 = vmatprep.subr.mxu0 0.0
  %138 = vmatpush1.msra.mxu0 0.0
  %139 = vmatprep.subr.mxu0 0.0
  %140 = vmatpush1.msra.mxu0 0.0
  %141 = vmatprep.subr.mxu0 0.0
  %142 = vmatpush1.msra.mxu0 0.0
  %143 = vmatprep.subr.mxu0 0.0
  %144 = vmatpush1.msra.mxu0 0.0
  %145 = vmatprep.subr.mxu0 0.0
  %146 = vmatpush1.msra.mxu0 0.0
  %147 = vmatprep.subr.mxu0 0.0
  %148 = vmatpush1.msra.mxu0 0.0
  %149 = vmatprep.subr.mxu0 0.0
  %150 = vmatpush1.msra.mxu0 0.0
  %151 = vmatprep.subr.mxu0 0.0
  %152 = vmatpush1.msra.mxu0 0.0
  %153 = vmatprep.subr.mxu0 0.0
  %154 = vmatpush1.msra.mxu0 0.0
  %155 = vmatprep.subr.mxu0 0.0
  %156 = vmatpush1.msra.mxu0 0.0
  %157 = vmatprep.subr.mxu0 0.0
  %158 = vmatpush1.msra.mxu0 0.0
  %159 = vmatprep.subr.mxu0 0.0
  %160 = vmatpush1.msra.mxu0 0.0
  %161 = vmatprep.subr.mxu0 0.0
  %162 = vmatpush1.msra.mxu0 0.0
  %163 = vmatprep.subr.mxu0 0.0
  %164 = vmatpush1.msra.mxu0 0.0
  %165 = vmatprep.subr.mxu0 0.0
  %166 = vmatpush1.msra.mxu0 0.0
  %167 = vmatprep.subr.mxu0 0.0
  %168 = vmatpush1.msra.mxu0 0.0
  %169 = vmatprep.subr.mxu0 0.0
  %170 = vmatpush1.msra.mxu0 0.0
  %171 = vmatprep.subr.mxu0 0.0
  %172 = vmatpush1.msra.mxu0 0.0
  %173 = vmatprep.subr.mxu0 0.0
  %174 = vmatpush1.msra.mxu0 0.0
  %175 = vmatprep.subr.mxu0 0.0
  %176 = vmatpush1.msra.mxu0 0.0
  %177 = vmatprep.subr.mxu0 0.0
  %178 = vmatpush1.msra.mxu0 0.0
  %179 = vmatprep.subr.mxu0 0.0
  %180 = vmatpush1.msra.mxu0 0.0
  %181 = vmatprep.subr.mxu0 0.0
  %182 = vmatpush1.msra.mxu0 0.0
  %183 = vmatprep.subr.mxu0 0.0
  %184 = vmatpush1.msra.mxu0 0.0
  %185 = vmatprep.subr.mxu0 0.0
  %186 = vmatpush1.msra.mxu0 0.0
  %187 = vmatprep.subr.mxu0 0.0
  %188 = vmatpush1.msra.mxu0 0.0
  %189 = vmatprep.subr.mxu0 0.0
  %190 = vmatpush1.msra.mxu0 0.0
  %191 = vmatprep.subr.mxu0 0.0
  %192 = vmatpush1.msra.mxu0 0.0
  %193 = vmatprep.subr.mxu0 0.0
  %194 = vmatpush1.msra.mxu0 0.0
  %195 = vmatprep.subr.mxu0 0.0
  %196 = vmatpush1.msra.mxu0 0.0
  %197 = vmatprep.subr.mxu0 0.0
  %198 = vmatpush1.msra.mxu0 0.0
  %199 = vmatprep.mubr.f32.mxu0 0.0
  %200 = vmatmul.mubr.f32.gmra.mrb[0].mxu0 %v49
  %v201 = vpop.f32.mrb[0].mxu0
  %v202 = vadd.f32 %v38, %v201
  %v203 = vpop.f32.mrb[0].mxu0
  %v204 = vadd.f32 %v42, %v203
  %205 = vdwg.mxu0
  %v206 = vmax.f32 %v131, 0.0
  %v207 = vmax.f32 %v133, 0.0
  %v208 = vmax.f32 %v202, 0.0
  %v209 = vmax.f32 %v204, 0.0
  %v210 = vld [vmem:[%s3] sm:$0xff]
  %v211 = vld [vmem:[%s3 + $0x8] sm:$0xff]
  %v212 = vld [vmem:[%s3 + $0x10] sm:$0xff]
  %v213 = vld [vmem:[%s3 + $0x18] sm:$0xff]
  %v214 = vld [vmem:[%s3 + $0x20] sm:$0xff]
  %v215 = vld [vmem:[%s3 + $0x28] sm:$0xff]
  %v216 = vld [vmem:[%s3 + $0x30] sm:$0xff]
  %v217 = vld [vmem:[%s3 + $0x38] sm:$0xff]
  %v218 = vld [vmem:[%s3 + $0x40] sm:$0xff]
  %v219 = vld [vmem:[%s3 + $0x48] sm:$0xff]
  %v220 = vld [vmem:[%s3 + $0x50] sm:$0xff]
  %v221 = vld [vmem:[%s3 + $0x58] sm:$0xff]
  %v222 = vld [vmem:[%s3 + $0x60] sm:$0xff]
  %v223 = vld [vmem:[%s3 + $0x68] sm:$0xff]
  %v224 = vld [vmem:[%s3 + $0x70] sm:$0xff]
  %v225 = vld [vmem:[%s3 + $0x78] sm:$0xff]
  %v226 = vld [vmem:[%s3 + $0x80] sm:$0xff]
  %v227 = vld [vmem:[%s3 + $0x88] sm:$0xff]
  %v228 = vld [vmem:[%s3 + $0x90] sm:$0xff]
  %v229 = vld [vmem:[%s3 + $0x98] sm:$0xff]
  %v230 = vld [vmem:[%s3 + $0xa0] sm:$0xff]
  %v231 = vld [vmem:[%s3 + $0xa8] sm:$0xff]
  %v232 = vld [vmem:[%s3 + $0xb0] sm:$0xff]
  %v233 = vld [vmem:[%s3 + $0xb8] sm:$0xff]
  %v234 = vld [vmem:[%s3 + $0xc0] sm:$0xff]
  %v235 = vld [vmem:[%s3 + $0xc8] sm:$0xff]
  %v236 = vld [vmem:[%s3 + $0xd0] sm:$0xff]
  %v237 = vld [vmem:[%s3 + $0xd8] sm:$0xff]
  %v238 = vld [vmem:[%s3 + $0xe0] sm:$0xff]
  %v239 = vld [vmem:[%s3 + $0xe8] sm:$0xff]
  %v240 = vld [vmem:[%s3 + $0xf0] sm:$0xff]
  %v241 = vld [vmem:[%s3 + $0xf8] sm:$0xff]
  %v242 = vld [vmem:[%s3 + $0x100] sm:$0xff]
  %v243 = vld [vmem:[%s3 + $0x108] sm:$0xff]
  %v244 = vld [vmem:[%s3 + $0x110] sm:$0xff]
  %v245 = vld [vmem:[%s3 + $0x118] sm:$0xff]
  %v246 = vld [vmem:[%s3 + $0x120] sm:$0xff]
  %v247 = vld [vmem:[%s3 + $0x128] sm:$0xff]
  %v248 = vld [vmem:[%s3 + $0x130] sm:$0xff]
  %v249 = vld [vmem:[%s3 + $0x138] sm:$0xff]
  %v250 = vld [vmem:[%s3 + $0x140] sm:$0xff]
  %v251 = vld [vmem:[%s3 + $0x148] sm:$0xff]
  %v252 = vld [vmem:[%s3 + $0x150] sm:$0xff]
  %v253 = vld [vmem:[%s3 + $0x158] sm:$0xff]
  %v254 = vld [vmem:[%s3 + $0x160] sm:$0xff]
  %v255 = vld [vmem:[%s3 + $0x168] sm:$0xff]
  %v256 = vld [vmem:[%s3 + $0x170] sm:$0xff]
  %v257 = vld [vmem:[%s3 + $0x178] sm:$0xff]
  %v258 = vld [vmem:[%s3 + $0x180] sm:$0xff]
  %v259 = vld [vmem:[%s3 + $0x188] sm:$0xff]
  %v260 = vld [vmem:[%s3 + $0x190] sm:$0xff]
  %v261 = vld [vmem:[%s3 + $0x198] sm:$0xff]
  %v262 = vld [vmem:[%s3 + $0x1a0] sm:$0xff]
  %v263 = vld [vmem:[%s3 + $0x1a8] sm:$0xff]
  %v264 = vld [vmem:[%s3 + $0x1b0] sm:$0xff]
  %v265 = vld [vmem:[%s3 + $0x1b8] sm:$0xff]
  %v266 = vld [vmem:[%s3 + $0x1c0] sm:$0xff]
  %v267 = vld [vmem:[%s3 + $0x1c8] sm:$0xff]
  %v268 = vld [vmem:[%s3 + $0x1d0] sm:$0xff]
  %v269 = vld [vmem:[%s3 + $0x1d8] sm:$0xff]
  %v270 = vld [vmem:[%s3 + $0x1e0] sm:$0xff]
  %v271 = vld [vmem:[%s3 + $0x1e8] sm:$0xff]
  %v272 = vld [vmem:[%s3 + $0x1f0] sm:$0xff]
  %v273 = vld [vmem:[%s3 + $0x1f8] sm:$0xff]
  %v274 = vld [vmem:[%s4] sm:$0x1]
  %v276 = vlaneseq
  %v277 = vshrl.u32 %v276, 7
  %v278 = vsub.s32 0, %v277
  %v279 = vrot.slane %v274, %v278
  %281 = vmatprep.subr.mxu0 0.0
  %282 = vmatpush1.msra.mxu0 %v210
  %283 = vmatprep.subr.mxu0 0.0
  %284 = vmatpush1.msra.mxu0 %v211
  %285 = vmatprep.subr.mxu0 0.0
  %286 = vmatpush1.msra.mxu0 %v212
  %287 = vmatprep.subr.mxu0 0.0
  %288 = vmatpush1.msra.mxu0 %v213
  %289 = vmatprep.subr.mxu0 0.0
  %290 = vmatpush1.msra.mxu0 %v214
  %291 = vmatprep.subr.mxu0 0.0
  %292 = vmatpush1.msra.mxu0 %v215
  %293 = vmatprep.subr.mxu0 0.0
  %294 = vmatpush1.msra.mxu0 %v216
  %295 = vmatprep.subr.mxu0 0.0
  %296 = vmatpush1.msra.mxu0 %v217
  %297 = vmatprep.subr.mxu0 0.0
  %298 = vmatpush1.msra.mxu0 %v218
  %299 = vmatprep.subr.mxu0 0.0
  %300 = vmatpush1.msra.mxu0 %v219
  %301 = vmatprep.subr.mxu0 0.0
  %302 = vmatpush1.msra.mxu0 %v220
  %303 = vmatprep.subr.mxu0 0.0
  %304 = vmatpush1.msra.mxu0 %v221
  %305 = vmatprep.subr.mxu0 0.0
  %306 = vmatpush1.msra.mxu0 %v222
  %307 = vmatprep.subr.mxu0 0.0
  %308 = vmatpush1.msra.mxu0 %v223
  %309 = vmatprep.subr.mxu0 0.0
  %310 = vmatpush1.msra.mxu0 %v224
  %311 = vmatprep.subr.mxu0 0.0
  %312 = vmatpush1.msra.mxu0 %v225
  %313 = vmatprep.subr.mxu0 0.0
  %314 = vmatpush1.msra.mxu0 %v226
  %315 = vmatprep.subr.mxu0 0.0
  %316 = vmatpush1.msra.mxu0 %v227
  %317 = vmatprep.subr.mxu0 0.0
  %318 = vmatpush1.msra.mxu0 %v228
  %319 = vmatprep.subr.mxu0 0.0
  %320 = vmatpush1.msra.mxu0 %v229
  %321 = vmatprep.subr.mxu0 0.0
  %322 = vmatpush1.msra.mxu0 %v230
  %323 = vmatprep.subr.mxu0 0.0
  %324 = vmatpush1.msra.mxu0 %v231
  %325 = vmatprep.subr.mxu0 0.0
  %326 = vmatpush1.msra.mxu0 %v232
  %327 = vmatprep.subr.mxu0 0.0
  %328 = vmatpush1.msra.mxu0 %v233
  %329 = vmatprep.subr.mxu0 0.0
  %330 = vmatpush1.msra.mxu0 %v234
  %331 = vmatprep.subr.mxu0 0.0
  %332 = vmatpush1.msra.mxu0 %v235
  %333 = vmatprep.subr.mxu0 0.0
  %334 = vmatpush1.msra.mxu0 %v236
  %335 = vmatprep.subr.mxu0 0.0
  %336 = vmatpush1.msra.mxu0 %v237
  %337 = vmatprep.subr.mxu0 0.0
  %338 = vmatpush1.msra.mxu0 %v238
  %339 = vmatprep.subr.mxu0 0.0
  %340 = vmatpush1.msra.mxu0 %v239
  %341 = vmatprep.subr.mxu0 0.0
  %342 = vmatpush1.msra.mxu0 %v240
  %343 = vmatprep.subr.mxu0 0.0
  %344 = vmatpush1.msra.mxu0 %v241
  %345 = vmatprep.mubr.f32.mxu0 %v207
  %346 = vmatmul.mubr.f32.gmra.mrb[0].mxu0 %v206
  %v347 = vpop.f32.mrb[0].mxu0
  %v348 = vadd.f32 %v279, %v347
  %v349 = vpop.f32.mrb[0].mxu0
  %350 = vdwg.mxu0
  %351 = vmatprep.subr.mxu0 0.0
  %352 = vmatpush1.msra.mxu0 %v242
  %353 = vmatprep.subr.mxu0 0.0
  %354 = vmatpush1.msra.mxu0 %v243
  %355 = vmatprep.subr.mxu0 0.0
  %356 = vmatpush1.msra.mxu0 %v244
  %357 = vmatprep.subr.mxu0 0.0
  %358 = vmatpush1.msra.mxu0 %v245
  %359 = vmatprep.subr.mxu0 0.0
  %360 = vmatpush1.msra.mxu0 %v246
  %361 = vmatprep.subr.mxu0 0.0
  %362 = vmatpush1.msra.mxu0 %v247
  %363 = vmatprep.subr.mxu0 0.0
  %364 = vmatpush1.msra.mxu0 %v248
  %365 = vmatprep.subr.mxu0 0.0
  %366 = vmatpush1.msra.mxu0 %v249
  %367 = vmatprep.subr.mxu0 0.0
  %368 = vmatpush1.msra.mxu0 %v250
  %369 = vmatprep.subr.mxu0 0.0
  %370 = vmatpush1.msra.mxu0 %v251
  %371 = vmatprep.subr.mxu0 0.0
  %372 = vmatpush1.msra.mxu0 %v252
  %373 = vmatprep.subr.mxu0 0.0
  %374 = vmatpush1.msra.mxu0 %v253
  %375 = vmatprep.subr.mxu0 0.0
  %376 = vmatpush1.msra.mxu0 %v254
  %377 = vmatprep.subr.mxu0 0.0
  %378 = vmatpush1.msra.mxu0 %v255
  %379 = vmatprep.subr.mxu0 0.0
  %380 = vmatpush1.msra.mxu0 %v256
  %381 = vmatprep.subr.mxu0 0.0
  %382 = vmatpush1.msra.mxu0 %v257
  %383 = vmatprep.subr.mxu0 0.0
  %384 = vmatpush1.msra.mxu0 %v258
  %385 = vmatprep.subr.mxu0 0.0
  %386 = vmatpush1.msra.mxu0 %v259
  %387 = vmatprep.subr.mxu0 0.0
  %388 = vmatpush1.msra.mxu0 %v260
  %389 = vmatprep.subr.mxu0 0.0
  %390 = vmatpush1.msra.mxu0 %v261
  %391 = vmatprep.subr.mxu0 0.0
  %392 = vmatpush1.msra.mxu0 %v262
  %393 = vmatprep.subr.mxu0 0.0
  %394 = vmatpush1.msra.mxu0 %v263
  %395 = vmatprep.subr.mxu0 0.0
  %396 = vmatpush1.msra.mxu0 %v264
  %397 = vmatprep.subr.mxu0 0.0
  %398 = vmatpush1.msra.mxu0 %v265
  %399 = vmatprep.subr.mxu0 0.0
  %400 = vmatpush1.msra.mxu0 %v266
  %401 = vmatprep.subr.mxu0 0.0
  %402 = vmatpush1.msra.mxu0 %v267
  %403 = vmatprep.subr.mxu0 0.0
  %404 = vmatpush1.msra.mxu0 %v268
  %405 = vmatprep.subr.mxu0 0.0
  %406 = vmatpush1.msra.mxu0 %v269
  %407 = vmatprep.subr.mxu0 0.0
  %408 = vmatpush1.msra.mxu0 %v270
  %409 = vmatprep.subr.mxu0 0.0
  %410 = vmatpush1.msra.mxu0 %v271
  %411 = vmatprep.subr.mxu0 0.0
  %412 = vmatpush1.msra.mxu0 %v272
  %413 = vmatprep.subr.mxu0 0.0
  %414 = vmatpush1.msra.mxu0 %v273
  %415 = vmatprep.mubr.f32.mxu0 %v209
  %416 = vmatmul.mubr.f32.gmra.mrb[0].mxu0 %v208
  %v417 = vpop.f32.mrb[0].mxu0
  %v418 = vadd.f32 %v348, %v417
  %v419 = vpop.f32.mrb[0].mxu0
  %420 = vdwg.mxu0
  %vm421 = vcmask 23552
  %422 = vst.msk [vmem:[%s5] sm:$0xff] %vm421, %v418
  // Predicated region
  $region22: #{tpu_custom_call.1} parent=0 // pred_check
    _
  $region23: #{tpu_custom_call.1} parent=0 // pred_check_branch
    %424 = sbr.rel (0) target = $region25
  $region24: #{tpu_custom_call.1} parent=0 // pred_region
    _
  $region25: #{tpu_custom_call.1} parent=0 // pred_fallthru
    _
  // Predicated region
  $region26: #{tpu_custom_call.1} parent=0 // pred_check
    _
  $region27: #{tpu_custom_call.1} parent=0 // pred_check_branch
    %426 = sbr.rel (0) target = $region29
  $region28: #{tpu_custom_call.1} parent=0 // pred_region
    _
  $region29: #{tpu_custom_call.1} parent=0 // pred_fallthru
    _

</llo_original>
